<compile_context>
chip_gen: v7x
topology: tpu7x:2x2x1
jax: 0.10.0
libtpu: 0.0.40
codegen_flags: <defaults>
</compile_context>

<pallas_src>
import jax
import jax.numpy as jnp
from jax.experimental import pallas as pl
from jax.experimental.pallas import tpu as pltpu

EMB_ROWS = 128 * 128          # nn.Embedding(128*128, 32)
EMB_DIM = 32
OUT_DIM = 32
IN_DIM = 2 + EMB_DIM          # lng + lat + grid embedding = 34

PACK = 4                      # tokens packed per 128-lane row
LANES = PACK * OUT_DIM        # 128  (packed output / grids lane width)
COORD_LANES = PACK * 2        # 8    (packed [lng,lat] lane width)
TILE_N = 8192                 # tokens per grid step (~5-6 MiB double-buffered)
MIN_TILE_N = PACK * 8         # 32 tokens = 8 packed sublanes (minimum legal tile)


def _round_up(x, m):
    return (x + m - 1) // m * m


def _pick_tile(n_tokens, tile_n):
    tile_n = max(MIN_TILE_N, _round_up(int(tile_n), MIN_TILE_N))
    if n_tokens <= tile_n:
        if n_tokens > 2 * MIN_TILE_N:
            # Shrink to ~half so the grid has >=2 steps: keeps both v7x
            # TensorCores busy under dimension_semantics=("parallel",).
            tile_n = _round_up(-(-n_tokens // 2), MIN_TILE_N)
        else:
            tile_n = MIN_TILE_N
    return tile_n


def road_kernel(coords_ref, grids_ref, wc_ref, wg_ref, b_ref, o_ref):
    """One lane-dense tile; 4 tokens per 128-lane row.

    coords: [Tp, 8]    f32        ([lng, lat] x 4 tokens per row)
    grids : [Tp, 128]  f32/bf16   (4 gathered embeddings side by side)
    wc    : [8, 128]   f32        kron(I4, W[:2])   -> coord contribution
    wg    : [128, 128] f32        kron(I4, W[2:])   -> block-diag grid weight
    b     : [1, 128]   f32        bias tiled x4
    o     : [Tp, 128]  f32
    """
    g = grids_ref[...].astype(jnp.float32)        # upcast (bf16 stream) + f32 accumulate
    acc = jnp.dot(g, wg_ref[...], preferred_element_type=jnp.float32)
    acc = acc + jnp.dot(coords_ref[...], wc_ref[...],
                        preferred_element_type=jnp.float32)
    o_ref[...] = jnp.tanh(acc + b_ref[...]).astype(o_ref.dtype)


def road_forward(traj, emb_weight, w, b, *, tile_n=TILE_N,
                 emb_stream_dtype=jnp.float32):
    """Reproduces Road.forward.

    traj: dict with 'lngs' (B,S) f32, 'lats' (B,S) f32, 'grid_id' (B,S) int.
    emb_weight: (128*128, 32) f32
    w: (34, 32) f32   (transposed nn.Linear weight)
    b: (32,)   f32
    emb_stream_dtype: dtype for the gathered-embedding stream. jnp.bfloat16
        halves the dominant HBM stream (accumulation stays f32; outputs then
        differ from the f32 reference at ~1e-3 abs). Default f32 keeps exact
        module semantics.
    returns: (B, S, 32) f32
    """
    B, S = traj['lngs'].shape
    N = B * S

    lngs = traj['lngs'].astype(jnp.float32).reshape(-1)
    lats = traj['lats'].astype(jnp.float32).reshape(-1)
    gids = traj['grid_id'].astype(jnp.int32).reshape(-1)

    tile_n = _pick_tile(N, tile_n)
    n_pad = _round_up(N, tile_n)

    # Pad BEFORE the gather: only 12 B/row of ids+coords, instead of padding
    # the (N,32) gather output (a full extra HBM read+write pass).
    if n_pad != N:
        pad = n_pad - N
        lngs = jnp.pad(lngs, (0, pad))
        lats = jnp.pad(lats, (0, pad))
        gids = jnp.pad(gids, (0, pad))          # id 0 is valid; tail sliced off below

    # Embedding gather stays in XLA (HBM-bound either way).
    emb_stream = emb_weight.astype(emb_stream_dtype)
    grids = jnp.take(emb_stream, gids, axis=0)                    # (n_pad, 32)

    # Lane-dense packed views (free, row-major reshapes).
    n_rows = n_pad // PACK
    grids_packed = grids.reshape(n_rows, LANES)                   # (n_pad/4, 128)
    coords_packed = jnp.stack([lngs, lats], axis=1).reshape(n_rows, COORD_LANES)

    # Block-expanded parameters (built once; VMEM-resident across the grid).
    w = w.astype(jnp.float32)
    eye4 = jnp.eye(PACK, dtype=jnp.float32)
    wc_blk = jnp.kron(eye4, w[:2, :])                             # (8, 128)
    wg_blk = jnp.kron(eye4, w[2:, :])                             # (128, 128)
    b_blk = jnp.tile(b.astype(jnp.float32), PACK).reshape(1, LANES)

    tp = tile_n // PACK                                           # packed rows / step
    grid_steps = n_rows // tp

    cost = pl.CostEstimate(
        flops=2 * n_pad * IN_DIM * OUT_DIM,
        transcendentals=n_pad * OUT_DIM,
        bytes_accessed=(grids_packed.size * grids_packed.dtype.itemsize
                        + coords_packed.size * 4
                        + n_rows * LANES * 4
                        + (wg_blk.size + wc_blk.size + b_blk.size) * 4),
    )

    out_packed = pl.pallas_call(
        road_kernel,
        out_shape=jax.ShapeDtypeStruct((n_rows, LANES), jnp.float32),
        grid=(grid_steps,),
        in_specs=[
            # streamed per grid step (double-buffered by Pallas)
            pl.BlockSpec((tp, COORD_LANES), lambda i: (i, 0)),
            pl.BlockSpec((tp, LANES), lambda i: (i, 0)),
            # VMEM-resident parameters (constant index maps)
            pl.BlockSpec((COORD_LANES, LANES), lambda i: (0, 0)),
            pl.BlockSpec((LANES, LANES), lambda i: (0, 0)),
            pl.BlockSpec((1, LANES), lambda i: (0, 0)),
        ],
        out_specs=pl.BlockSpec((tp, LANES), lambda i: (i, 0)),
        compiler_params=pltpu.CompilerParams(
            dimension_semantics=("parallel",)),   # rows independent -> v7x 2-TC
        cost_estimate=cost,
    )(coords_packed, grids_packed, wc_blk, wg_blk, b_blk)

    out = out_packed.reshape(n_pad, OUT_DIM)
    if n_pad != N:
        out = out[:N]
    return out.reshape(B, S, OUT_DIM)


if __name__ == "__main__":
    key = jax.random.PRNGKey(0)
    k_emb, k_w, k_b, k_lng, k_lat, k_gid = jax.random.split(key, 6)

    # Deterministic synthetic parameters (replaces 'Config/embedding_128.npy'
    # and the nn.Linear init).
    emb_weight = jax.random.normal(k_emb, (EMB_ROWS, EMB_DIM), jnp.float32) * 0.1
    w = jax.random.normal(k_w, (IN_DIM, OUT_DIM), jnp.float32) * 0.1
    b = jax.random.normal(k_b, (OUT_DIM,), jnp.float32) * 0.1

    def reference(traj):
        # Plain-JAX reference, same math as the PyTorch forward.
        grids_ref = jnp.take(emb_weight, traj['grid_id'].reshape(-1), axis=0)
        locs_ref = jnp.concatenate(
            [traj['lngs'].reshape(-1, 1), traj['lats'].reshape(-1, 1), grids_ref],
            axis=1)
        Bq, Sq = traj['lngs'].shape
        return jnp.tanh(locs_ref @ w + b).reshape(Bq, Sq, OUT_DIM)

    # Case 1: small spec shape (single packed tile), f32 stream -> exact path.
    B, S = 2, 8
    traj = {
        'lngs': jax.random.normal(k_lng, (B, S), jnp.float32),
        'lats': jax.random.normal(k_lat, (B, S), jnp.float32),
        'grid_id': jax.random.randint(k_gid, (B, S), 0, EMB_ROWS, jnp.int32),
    }
    out = jax.block_until_ready(road_forward(traj, emb_weight, w, b))
    assert out.shape == (B, S, OUT_DIM)
    assert jnp.allclose(out, reference(traj), atol=1e-4, rtol=1e-4)

    # Case 2: multi-tile + padded-tail path (pipelined grid, 3 steps) with the
    # bf16 embedding-stream fast path (tolerance-gated).
    B2, S2 = 3, 100   # N = 300 -> padded to 384 tokens with tile_n=128, grid=3
    traj2 = {
        'lngs': jax.random.normal(k_lng, (B2, S2), jnp.float32),
        'lats': jax.random.normal(k_lat, (B2, S2), jnp.float32),
        'grid_id': jax.random.randint(k_gid, (B2, S2), 0, EMB_ROWS, jnp.int32),
    }
    out2 = jax.block_until_ready(
        road_forward(traj2, emb_weight, w, b, tile_n=128,
                     emb_stream_dtype=jnp.bfloat16))
    assert out2.shape == (B2, S2, OUT_DIM)
    assert jnp.allclose(out2, reference(traj2), atol=5e-3, rtol=5e-3)

    # Case 2b: same shape, f32 stream -> tight tolerance (exact semantics).
    out2f = jax.block_until_ready(
        road_forward(traj2, emb_weight, w, b, tile_n=128))
    assert jnp.allclose(out2f, reference(traj2), atol=1e-4, rtol=1e-4)

    print("KERNEL_OK")
</pallas_src>

<mosaic_0001>
module attributes {stable_mosaic.version = 11 : i64} {
  func.func @road_kernel(%arg0: i32, %arg1: memref<8x8xf32, #tpu.memory_space<vmem>>, %arg2: memref<8x128xf32, #tpu.memory_space<vmem>>, %arg3: memref<8x128xf32, #tpu.memory_space<vmem>>, %arg4: memref<128x128xf32, #tpu.memory_space<vmem>>, %arg5: memref<1x128xf32, #tpu.memory_space<vmem>>, %arg6: memref<8x128xf32, #tpu.memory_space<vmem>>) attributes {dimension_semantics = [#tpu.dimension_semantics<parallel>], iteration_bounds = array<i64: 1>, scalar_prefetch = 0 : i64, scratch_operands = 0 : i64, tpu.core_type = #tpu.core_type<tc>, window_params = [{transform_indices = @transform_0, window_bounds = array<i64: 8, 8>}, {transform_indices = @transform_1, window_bounds = array<i64: 8, 128>}, {pipeline_mode = #tpu.pipeline_mode<synchronous>, transform_indices = @transform_2, window_bounds = array<i64: 8, 128>}, {pipeline_mode = #tpu.pipeline_mode<synchronous>, transform_indices = @transform_3, window_bounds = array<i64: 128, 128>}, {pipeline_mode = #tpu.pipeline_mode<synchronous>, transform_indices = @transform_4, window_bounds = array<i64: 1, 128>}, {transform_indices = @transform_5, window_bounds = array<i64: 8, 128>}]} {
    %c0 = arith.constant 0 : index
    %c0_0 = arith.constant 0 : index
    %0 = vector.load %arg2[%c0, %c0_0] : memref<8x128xf32, #tpu.memory_space<vmem>>, vector<8x128xf32>
    %c0_1 = arith.constant 0 : index
    %c0_2 = arith.constant 0 : index
    %1 = vector.load %arg4[%c0_1, %c0_2] : memref<128x128xf32, #tpu.memory_space<vmem>>, vector<128x128xf32>
    %cst = arith.constant dense<0.000000e+00> : vector<8x128xf32>
    %2 = tpu.matmul %0, %1, %cst {dimension_numbers = #tpu.dot_dimension_numbers<[1], [0], [0], [1], [0, 0, 1, 1], [], []>} : vector<8x128xf32>, vector<128x128xf32>, vector<8x128xf32> -> vector<8x128xf32>
    %c0_3 = arith.constant 0 : index
    %c0_4 = arith.constant 0 : index
    %3 = vector.load %arg1[%c0_3, %c0_4] : memref<8x8xf32, #tpu.memory_space<vmem>>, vector<8x8xf32>
    %c0_5 = arith.constant 0 : index
    %c0_6 = arith.constant 0 : index
    %4 = vector.load %arg3[%c0_5, %c0_6] : memref<8x128xf32, #tpu.memory_space<vmem>>, vector<8x128xf32>
    %cst_7 = arith.constant dense<0.000000e+00> : vector<8x128xf32>
    %5 = tpu.matmul %3, %4, %cst_7 {dimension_numbers = #tpu.dot_dimension_numbers<[1], [0], [0], [1], [0, 0, 1, 1], [], []>} : vector<8x8xf32>, vector<8x128xf32>, vector<8x128xf32> -> vector<8x128xf32>
    %6 = arith.addf %2, %5 : vector<8x128xf32>
    %c0_8 = arith.constant 0 : index
    %c0_9 = arith.constant 0 : index
    %7 = vector.load %arg5[%c0_8, %c0_9] : memref<1x128xf32, #tpu.memory_space<vmem>>, vector<1x128xf32>
    %8 = vector.broadcast %7 : vector<1x128xf32> to vector<8x128xf32>
    %9 = arith.addf %6, %8 : vector<8x128xf32>
    %10 = math.tanh %9 : vector<8x128xf32>
    %c0_10 = arith.constant 0 : index
    %c0_11 = arith.constant 0 : index
    %11 = vector.load %arg6[%c0_10, %c0_11] : memref<8x128xf32, #tpu.memory_space<vmem>>, vector<8x128xf32>
    tpu.vector_store %arg6[%c0_10, %c0_11], %10 {strides = array<i32>} : memref<8x128xf32, #tpu.memory_space<vmem>>, vector<8x128xf32>,
    return
  }
  func.func @transform_0(%arg0: i32) -> (i32, i32) {
    %c0_i32 = arith.constant 0 : i32
    %c0_i32_0 = arith.constant 0 : i32
    return %arg0, %c0_i32 : i32, i32
  }
  func.func @transform_1(%arg0: i32) -> (i32, i32) {
    %c0_i32 = arith.constant 0 : i32
    %c0_i32_0 = arith.constant 0 : i32
    return %arg0, %c0_i32 : i32, i32
  }
  func.func @transform_2(%arg0: i32) -> (i32, i32) {
    %c0_i32 = arith.constant 0 : i32
    %c0_i32_0 = arith.constant 0 : i32
    %c0_i32_1 = arith.constant 0 : i32
    return %c0_i32, %c0_i32_0 : i32, i32
  }
  func.func @transform_3(%arg0: i32) -> (i32, i32) {
    %c0_i32 = arith.constant 0 : i32
    %c0_i32_0 = arith.constant 0 : i32
    %c0_i32_1 = arith.constant 0 : i32
    return %c0_i32, %c0_i32_0 : i32, i32
  }
  func.func @transform_4(%arg0: i32) -> (i32, i32) {
    %c0_i32 = arith.constant 0 : i32
    %c0_i32_0 = arith.constant 0 : i32
    %c0_i32_1 = arith.constant 0 : i32
    return %c0_i32, %c0_i32_0 : i32, i32
  }
  func.func @transform_5(%arg0: i32) -> (i32, i32) {
    %c0_i32 = arith.constant 0 : i32
    %c0_i32_0 = arith.constant 0 : i32
    return %arg0, %c0_i32 : i32, i32
  }
}

</mosaic_0001>

<llo_original>
// kernel: tpu_custom_call.1
$region0: #{tpu_custom_call.1}
  #allocation0 [shape = 'u32[]', space=smem, size = 0x4, offset = 0x4, fixed_abs, tag = 'smem constant byte address 0x4 - core index']
  #allocation1 [shape = 'u32[144,128]{1,0:T(1,128)}', space=vmem, size = 0x12000, scoped, tag = 'internal scratch']
  %s0 = inlined_call_operand.hbm [shape: f32[8,8], index: 0, kind: input, shape index: {}]
  %s1 = inlined_call_operand.hbm [shape: f32[8,128], index: 1, kind: input, shape index: {}]
  %s2 = inlined_call_operand.hbm [shape: f32[8,128], index: 2, kind: input, shape index: {}]
  %s3 = inlined_call_operand.hbm [shape: f32[128,128], index: 3, kind: input, shape index: {}]
  %s4 = inlined_call_operand.vmem [shape: f32[1,128], index: 4, kind: input, shape index: {}]
  %s5 = inlined_call_operand.hbm [shape: f32[8,128], index: 5, kind: output, shape index: {}]
  %s6 = sld [smem:[#allocation0]]
  $region46: #{tpu_custom_call.1} parent=0
    _
  %s8 = ssub.s32 1, %s6
  %s9 = scalar_select 0, %s8, %s6
  $region1: #{tpu_custom_call.1} parent=0
    #allocation2 [shape = 'u8[4096]{0}', space=vmem, size = 0x1000, scoped, tag = 'input window, operand 0, single buffered']
    #allocation3 [shape = 's32[1]{0}', space=sflag, size = 0x4, scoped, tag = 'scoped memory for tpu_custom_call.1']
    #allocation4 [shape = 's32[1]{0}', space=sflag, size = 0x4, scoped, tag = 'scoped memory for tpu_custom_call.1']
    #allocation5 [shape = 'u8[4096]{0}', space=vmem, size = 0x1000, scoped, tag = 'input window, operand 1, single buffered']
    #allocation6 [shape = 's32[1]{0}', space=sflag, size = 0x4, scoped, tag = 'scoped memory for tpu_custom_call.1']
    #allocation7 [shape = 'u8[4096]{0}', space=vmem, size = 0x1000, scoped, tag = 'input window, operand 2, single buffered']
    #allocation8 [shape = 'u8[65536]{0}', space=vmem, size = 0x10000, scoped, tag = 'input window, operand 3, single buffered']
    #allocation9 [shape = 's32[1]{0}', space=sflag, size = 0x4, scoped, tag = 'scoped memory for tpu_custom_call.1']
    #allocation10 [shape = 'u8[4096]{0}', space=vmem, size = 0x1000, scoped, tag = 'output window, operand 0, single buffered']
    %10 = vsyncpa [#allocation3], 0
    %11 = vsyncpa [#allocation6], 0
    %12 = vsyncpa [#allocation9], 0
    %13 = vsyncpa [#allocation4], 0
    // Predicated region
    $region2: #{tpu_custom_call.1} parent=1 // pred_check
      _
    $region3: #{tpu_custom_call.1} parent=1 // pred_check_branch
      %15 = sbr.rel (0) target = $region5
    $region4: #{tpu_custom_call.1} parent=1 // pred_region
      %s17 = ssub.s32 128, 128
      %18 = vsyncadd [#allocation3], %s17
      %s20 = sshll.u32 [#allocation2], 4
      %s21 = int_to_ptr.vmem [resolvable:$true] %s20
      %23 = dma.hbm_to_vmem [thread:$0]  %s0, 128, %s21, [#allocation3]
    $region5: #{tpu_custom_call.1} parent=1 // pred_fallthru
      _
    // Predicated region
    $region6: #{tpu_custom_call.1} parent=1 // pred_check
      _
    $region7: #{tpu_custom_call.1} parent=1 // pred_check_branch
      %25 = sbr.rel (0) target = $region9
    $region8: #{tpu_custom_call.1} parent=1 // pred_region
      %s27 = ssub.s32 128, 128
      %28 = vsyncadd [#allocation6], %s27
      %s30 = sshll.u32 [#allocation5], 4
      %s31 = int_to_ptr.vmem [resolvable:$true] %s30
      %33 = dma.hbm_to_vmem [thread:$0]  %s1, 128, %s31, [#allocation6]
    $region9: #{tpu_custom_call.1} parent=1 // pred_fallthru
      _
    // Predicated region
    $region10: #{tpu_custom_call.1} parent=1 // pred_check
      _
    $region11: #{tpu_custom_call.1} parent=1 // pred_check_branch
      %35 = sbr.rel (0) target = $region13
    $region12: #{tpu_custom_call.1} parent=1 // pred_region
      %s37 = ssub.s32 128, 128
      %38 = vsyncadd [#allocation6], %s37
      %s40 = sshll.u32 [#allocation7], 4
      %s41 = int_to_ptr.vmem [resolvable:$true] %s40
      %43 = dma.hbm_to_vmem [thread:$0]  %s2, 128, %s41, [#allocation6]
    $region13: #{tpu_custom_call.1} parent=1 // pred_fallthru
      _
    // Predicated region
    $region14: #{tpu_custom_call.1} parent=1 // pred_check
      _
    $region15: #{tpu_custom_call.1} parent=1 // pred_check_branch
      %45 = sbr.rel (0) target = $region17
    $region16: #{tpu_custom_call.1} parent=1 // pred_region
      %s47 = ssub.s32 2048, 2048
      %48 = vsyncadd [#allocation9], %s47
      %s49 = sshll.u32 [#allocation8], 4
      %s50 = int_to_ptr.vmem [resolvable:$true] %s49
      %55 = dma.hbm_to_vmem [thread:$0]  %s3, 2048, %s50, [#allocation9], 128, 128, 8
    $region17: #{tpu_custom_call.1} parent=1 // pred_fallthru
      _
    // Predicated region
    $region18: #{tpu_custom_call.1} parent=1 // pred_check
      _
    $region19: #{tpu_custom_call.1} parent=1 // pred_check_branch
      %57 = sbr.rel (0) target = $region21
    $region20: #{tpu_custom_call.1} parent=1 // pred_region
      _
    $region21: #{tpu_custom_call.1} parent=1 // pred_fallthru
      _
    // Predicated region
    $region22: #{tpu_custom_call.1} parent=1 // pred_check
      _
    $region23: #{tpu_custom_call.1} parent=1 // pred_check_branch
      %59 = sbr.rel (0) target = $region25
    $region24: #{tpu_custom_call.1} parent=1 // pred_region
      %60 = dma.done [#allocation3], 128
    $region25: #{tpu_custom_call.1} parent=1 // pred_fallthru
      _
    // Predicated region
    $region26: #{tpu_custom_call.1} parent=1 // pred_check
      _
    $region27: #{tpu_custom_call.1} parent=1 // pred_check_branch
      %62 = sbr.rel (0) target = $region29
    $region28: #{tpu_custom_call.1} parent=1 // pred_region
      %63 = dma.done [#allocation6], 128
    $region29: #{tpu_custom_call.1} parent=1 // pred_fallthru
      _
    // Predicated region
    $region30: #{tpu_custom_call.1} parent=1 // pred_check
      _
    $region31: #{tpu_custom_call.1} parent=1 // pred_check_branch
      %65 = sbr.rel (0) target = $region33
    $region32: #{tpu_custom_call.1} parent=1 // pred_region
      %66 = dma.done [#allocation6], 128
    $region33: #{tpu_custom_call.1} parent=1 // pred_fallthru
      _
    // Predicated region
    $region34: #{tpu_custom_call.1} parent=1 // pred_check
      _
    $region35: #{tpu_custom_call.1} parent=1 // pred_check_branch
      %68 = sbr.rel (0) target = $region37
    $region36: #{tpu_custom_call.1} parent=1 // pred_region
      %69 = dma.done [#allocation9], 2048
    $region37: #{tpu_custom_call.1} parent=1 // pred_fallthru
      _
    %v70 = vld [vmem:[#allocation5] sm:$0xff]
    %v71 = vld [vmem:[#allocation8] sm:$0xff]
    %v72 = vld [vmem:[#allocation8 + $0x8] sm:$0xff]
    %v73 = vld [vmem:[#allocation8 + $0x10] sm:$0xff]
    %v74 = vld [vmem:[#allocation8 + $0x18] sm:$0xff]
    %v75 = vld [vmem:[#allocation8 + $0x20] sm:$0xff]
    %v76 = vld [vmem:[#allocation8 + $0x28] sm:$0xff]
    %v77 = vld [vmem:[#allocation8 + $0x30] sm:$0xff]
    %v78 = vld [vmem:[#allocation8 + $0x38] sm:$0xff]
    %v79 = vld [vmem:[#allocation8 + $0x40] sm:$0xff]
    %v80 = vld [vmem:[#allocation8 + $0x48] sm:$0xff]
    %v81 = vld [vmem:[#allocation8 + $0x50] sm:$0xff]
    %v82 = vld [vmem:[#allocation8 + $0x58] sm:$0xff]
    %v83 = vld [vmem:[#allocation8 + $0x60] sm:$0xff]
    %v84 = vld [vmem:[#allocation8 + $0x68] sm:$0xff]
    %v85 = vld [vmem:[#allocation8 + $0x70] sm:$0xff]
    %v86 = vld [vmem:[#allocation8 + $0x78] sm:$0xff]
    %v87 = vld [vmem:[#allocation2] sm:$0xff]
    %v88 = vld [vmem:[#allocation7] sm:$0xff]
    %vm89 = vcmask 64512
    %v91 = vsel %vm89, %v87, 0
    %93 = vmatprep.subr.mxu0 0.0
    %94 = vmatpush1.msra.mxu0 %v88
    %95 = vmatprep.subr.mxu0 0.0
    %96 = vmatpush1.msra.mxu0 0.0
    %97 = vmatprep.subr.mxu0 0.0
    %98 = vmatpush1.msra.mxu0 0.0
    %99 = vmatprep.subr.mxu0 0.0
    %100 = vmatpush1.msra.mxu0 0.0
    %101 = vmatprep.subr.mxu0 0.0
    %102 = vmatpush1.msra.mxu0 0.0
    %103 = vmatprep.subr.mxu0 0.0
    %104 = vmatpush1.msra.mxu0 0.0
    %105 = vmatprep.subr.mxu0 0.0
    %106 = vmatpush1.msra.mxu0 0.0
    %107 = vmatprep.subr.mxu0 0.0
    %108 = vmatpush1.msra.mxu0 0.0
    %109 = vmatprep.subr.mxu0 0.0
    %110 = vmatpush1.msra.mxu0 0.0
    %111 = vmatprep.subr.mxu0 0.0
    %112 = vmatpush1.msra.mxu0 0.0
    %113 = vmatprep.subr.mxu0 0.0
    %114 = vmatpush1.msra.mxu0 0.0
    %115 = vmatprep.subr.mxu0 0.0
    %116 = vmatpush1.msra.mxu0 0.0
    %117 = vmatprep.subr.mxu0 0.0
    %118 = vmatpush1.msra.mxu0 0.0
    %119 = vmatprep.subr.mxu0 0.0
    %120 = vmatpush1.msra.mxu0 0.0
    %121 = vmatprep.subr.mxu0 0.0
    %122 = vmatpush1.msra.mxu0 0.0
    %123 = vmatprep.subr.mxu0 0.0
    %124 = vmatpush1.msra.mxu0 0.0
    %125 = vmatprep.subr.mxu0 0.0
    %126 = vmatpush1.msra.mxu0 0.0
    %127 = vmatprep.subr.mxu0 0.0
    %128 = vmatpush1.msra.mxu0 0.0
    %129 = vmatprep.subr.mxu0 0.0
    %130 = vmatpush1.msra.mxu0 0.0
    %131 = vmatprep.subr.mxu0 0.0
    %132 = vmatpush1.msra.mxu0 0.0
    %133 = vmatprep.subr.mxu0 0.0
    %134 = vmatpush1.msra.mxu0 0.0
    %135 = vmatprep.subr.mxu0 0.0
    %136 = vmatpush1.msra.mxu0 0.0
    %137 = vmatprep.subr.mxu0 0.0
    %138 = vmatpush1.msra.mxu0 0.0
    %139 = vmatprep.subr.mxu0 0.0
    %140 = vmatpush1.msra.mxu0 0.0
    %141 = vmatprep.subr.mxu0 0.0
    %142 = vmatpush1.msra.mxu0 0.0
    %143 = vmatprep.subr.mxu0 0.0
    %144 = vmatpush1.msra.mxu0 0.0
    %145 = vmatprep.subr.mxu0 0.0
    %146 = vmatpush1.msra.mxu0 0.0
    %147 = vmatprep.subr.mxu0 0.0
    %148 = vmatpush1.msra.mxu0 0.0
    %149 = vmatprep.subr.mxu0 0.0
    %150 = vmatpush1.msra.mxu0 0.0
    %151 = vmatprep.subr.mxu0 0.0
    %152 = vmatpush1.msra.mxu0 0.0
    %153 = vmatprep.subr.mxu0 0.0
    %154 = vmatpush1.msra.mxu0 0.0
    %155 = vmatprep.subr.mxu0 0.0
    %156 = vmatpush1.msra.mxu0 0.0
    %157 = vmatprep.mubr.f32.mxu0 0.0
    %158 = vmatmul.mubr.f32.gmra.mrb[0].mxu0 %v91
    %v159 = vpop.f32.mrb[0].mxu0
    %v160 = vadd.f32 0.0, %v159
    %v161 = vpop.f32.mrb[0].mxu0
    %162 = vdwg.mxu0
    %163 = vmatprep.subr.mxu0 0.0
    %164 = vmatpush1.msra.mxu0 %v71
    %165 = vmatprep.subr.mxu0 0.0
    %166 = vmatpush1.msra.mxu0 %v72
    %167 = vmatprep.subr.mxu0 0.0
    %168 = vmatpush1.msra.mxu0 %v73
    %169 = vmatprep.subr.mxu0 0.0
    %170 = vmatpush1.msra.mxu0 %v74
    %171 = vmatprep.subr.mxu0 0.0
    %172 = vmatpush1.msra.mxu0 %v75
    %173 = vmatprep.subr.mxu0 0.0
    %174 = vmatpush1.msra.mxu0 %v76
    %175 = vmatprep.subr.mxu0 0.0
    %176 = vmatpush1.msra.mxu0 %v77
    %177 = vmatprep.subr.mxu0 0.0
    %178 = vmatpush1.msra.mxu0 %v78
    %179 = vmatprep.subr.mxu0 0.0
    %180 = vmatpush1.msra.mxu0 %v79
    %181 = vmatprep.subr.mxu0 0.0
    %182 = vmatpush1.msra.mxu0 %v80
    %183 = vmatprep.subr.mxu0 0.0
    %184 = vmatpush1.msra.mxu0 %v81
    %185 = vmatprep.subr.mxu0 0.0
    %186 = vmatpush1.msra.mxu0 %v82
    %187 = vmatprep.subr.mxu0 0.0
    %188 = vmatpush1.msra.mxu0 %v83
    %189 = vmatprep.subr.mxu0 0.0
    %190 = vmatpush1.msra.mxu0 %v84
    %191 = vmatprep.subr.mxu0 0.0
    %192 = vmatpush1.msra.mxu0 %v85
    %193 = vmatprep.subr.mxu0 0.0
    %194 = vmatpush1.msra.mxu0 %v86
    %195 = vmatprep.subr.mxu0 0.0
    %196 = vmatpush1.msra.mxu0 0.0
    %197 = vmatprep.subr.mxu0 0.0
    %198 = vmatpush1.msra.mxu0 0.0
    %199 = vmatprep.subr.mxu0 0.0
    %200 = vmatpush1.msra.mxu0 0.0
    %201 = vmatprep.subr.mxu0 0.0
    %202 = vmatpush1.msra.mxu0 0.0
    %203 = vmatprep.subr.mxu0 0.0
    %204 = vmatpush1.msra.mxu0 0.0
    %205 = vmatprep.subr.mxu0 0.0
    %206 = vmatpush1.msra.mxu0 0.0
    %207 = vmatprep.subr.mxu0 0.0
    %208 = vmatpush1.msra.mxu0 0.0
    %209 = vmatprep.subr.mxu0 0.0
    %210 = vmatpush1.msra.mxu0 0.0
    %211 = vmatprep.subr.mxu0 0.0
    %212 = vmatpush1.msra.mxu0 0.0
    %213 = vmatprep.subr.mxu0 0.0
    %214 = vmatpush1.msra.mxu0 0.0
    %215 = vmatprep.subr.mxu0 0.0
    %216 = vmatpush1.msra.mxu0 0.0
    %217 = vmatprep.subr.mxu0 0.0
    %218 = vmatpush1.msra.mxu0 0.0
    %219 = vmatprep.subr.mxu0 0.0
    %220 = vmatpush1.msra.mxu0 0.0
    %221 = vmatprep.subr.mxu0 0.0
    %222 = vmatpush1.msra.mxu0 0.0
    %223 = vmatprep.subr.mxu0 0.0
    %224 = vmatpush1.msra.mxu0 0.0
    %225 = vmatprep.subr.mxu0 0.0
    %226 = vmatpush1.msra.mxu0 0.0
    %227 = vmatprep.mubr.f32.mxu0 0.0
    %228 = vmatmul.mubr.f32.gmra.mrb[0].mxu0 %v70
    %v229 = vpop.f32.mrb[0].mxu0
    %v230 = vadd.f32 %v160, %v229
    %v231 = vpop.f32.mrb[0].mxu0
    %232 = vdwg.mxu0
    %v233 = vld [vmem:[%s4] sm:$0x1]
    %v235 = vlaneseq
    %v236 = vshrl.u32 %v235, 7
    %v237 = vsub.s32 0, %v236
    %v238 = vrot.slane %v233, %v237
    %v240 = vadd.f32 %v230, %v238
    %v241 = vtanh.pop %v240
    %242 = vst [vmem:[#allocation10] sm:$0xff] %v241
    // Predicated region
    $region38: #{tpu_custom_call.1} parent=1 // pred_check
      _
    $region39: #{tpu_custom_call.1} parent=1 // pred_check_branch
      %244 = sbr.rel (0) target = $region41
    $region40: #{tpu_custom_call.1} parent=1 // pred_region
      %s246 = ssub.s32 128, 128
      %247 = vsyncadd [#allocation4], %s246
      %s249 = sshll.u32 [#allocation10], 4
      %s250 = int_to_ptr.vmem [resolvable:$true] %s249
      %252 = dma.vmem_to_hbm [thread:$0]  %s250, 128, %s5, [#allocation4]
    $region41: #{tpu_custom_call.1} parent=1 // pred_fallthru
      _
    // Predicated region
    $region42: #{tpu_custom_call.1} parent=1 // pred_check
      _
    $region43: #{tpu_custom_call.1} parent=1 // pred_check_branch
      %254 = sbr.rel (0) target = $region45
    $region44: #{tpu_custom_call.1} parent=1 // pred_region
      %255 = dma.done [#allocation4], 128
    $region45: #{tpu_custom_call.1} parent=1 // pred_fallthru
      _
    %256 = vsyncpa [#allocation3], 1
    %257 = vsyncpa [#allocation6], 1
    %258 = vsyncpa [#allocation9], 1
    %259 = vsyncpa [#allocation4], 1

</llo_original>
